<compile_context>
chip_gen: v6e
topology: v6e:2x2x1
jax: 0.10.0
libtpu: 0.0.40
codegen_flags: <defaults>
</compile_context>

<pallas_src>
from functools import lru_cache, reduce

import jax
import jax.numpy as jnp
from jax.experimental import pallas as pl
from jax.experimental.pallas import tpu as pltpu


_MIN_PALLAS_BYTES = 256 << 10     # below this, plain XLA concatenate wins
_MIN_PIPELINE_BYTES = 8 << 20     # above this, insist on >= _MIN_GRID_STEPS steps
_MIN_GRID_STEPS = 8               # keeps DMA overlapped and both v7x TCs busy


def _prod(xs):
    return int(reduce(lambda a, b: a * b, xs, 1))


def _round_up(x, m):
    return ((x + m - 1) // m) * m


def _sublane_pack(itemsize):
    # rows per sublane tile: 8 for 4-byte types, 16 for bf16/fp16, 32 for int8
    return 8 * max(1, 4 // int(itemsize))


@lru_cache(maxsize=None)
def _chip_tuning():
    """(target_block_bytes, max_block_bytes, vmem_limit_bytes) per generation."""
    try:
        vmem_phys = int(pltpu.get_tpu_info().vmem_capacity_bytes)
    except Exception:
        vmem_phys = 64 << 20          # conservative default (works everywhere)
    if vmem_phys >= (96 << 20):
        # v5e / v6e: 128 MiB physical VMEM -> bigger blocks, higher limit.
        return (4 << 20, 6 << 20, 64 << 20)
    # v7x-class: 64 MiB physical VMEM -> keep the double-buffered in+out
    # working set (~4x the cap) well under the scoped limit.
    return (2 << 20, 4 << 20, 40 << 20)


def _choose_rows(outer, row_bytes, itemsize, target, cap, total_bytes):
    """Rows of the leading (outer) axis per block for the 2-D lane-folded path.

    Returns a layout-legal row count (a multiple of the dtype's sublane
    packing, or the full extent) whose block fits under `cap`, else None.
    """
    pack = _sublane_pack(itemsize)
    want = max(1, min(outer, target // max(row_bytes, 1)))
    # Keep the DMA pipeline (and both v7x TensorCores) fed on big tensors.
    if total_bytes >= _MIN_PIPELINE_BYTES and outer >= _MIN_GRID_STEPS * pack:
        want = min(want, outer // _MIN_GRID_STEPS)

    # Whole extent in one block only when it stays within a single target block.
    if outer * row_bytes <= min(target, cap):
        return int(outer)

    t = (want // pack) * pack
    if t >= pack and t * row_bytes <= cap:
        return int(t)
    if outer >= pack and pack * row_bytes <= cap:
        return int(pack)
    if outer < pack and outer * row_bytes <= cap:
        return int(outer)
    return None


def _choose_inner_chunk(inner, d_out, itemsize, target, cap):
    """Lane chunk (multiple of 128, or full `inner`) for the sublane-split path.

    Returns None when even a 128-lane slab of the full padded dim exceeds the
    block cap (the caller then falls back to the masked, lane-tiled path).
    """
    if d_out * inner * itemsize <= target:
        return int(inner)
    c = (target // max(d_out * itemsize, 1)) // 128 * 128
    c = min(max(c, 128), max((inner // 128) * 128, 128))
    if d_out * c * itemsize > cap:
        return None
    return int(c)


# --------------------------- kernels ---------------------------------------


def _make_lanefold_kernel(data_w, pad_w, value, pad_front):
    """2-D (rows, D*inner) blocks; the data/pad split sits on the lane axis."""

    def kernel(x_ref, o_ref):
        rows = o_ref.shape[0]
        fill = jnp.full((rows, pad_w), value, dtype=o_ref.dtype)
        if pad_front:
            o_ref[:, :pad_w] = fill
            o_ref[:, pad_w:] = x_ref[...]
        else:
            o_ref[:, :data_w] = x_ref[...]
            o_ref[:, data_w:] = fill

    return kernel


def _make_sublane_split_kernel(d_in, pad_amount, value, pad_front):
    """3-D (rows, D, inner-chunk) blocks; the split sits on the sublane axis."""

    def kernel(x_ref, o_ref):
        rows, _, c = o_ref.shape
        fill = jnp.full((rows, pad_amount, c), value, dtype=o_ref.dtype)
        if pad_front:
            o_ref[:, :pad_amount, :] = fill
            o_ref[:, pad_amount:, :] = x_ref[...]
        else:
            o_ref[:, :d_in, :] = x_ref[...]
            o_ref[:, d_in:, :] = fill

    return kernel


def _make_masked_append_kernel(w_in, value):
    """2-D lane-folded, lane-tiled blocks; data vs pad decided by a lane mask.

    The input lane-block index is clamped by the BlockSpec index_map, so every
    store here is a full, lane-dense tile write (append direction only)."""

    def kernel(x_ref, o_ref):
        c = o_ref.shape[-1]
        lane = jax.lax.broadcasted_iota(jnp.int32, o_ref.shape, dimension=1)
        global_lane = pl.program_id(1) * c + lane
        fill = jnp.full(o_ref.shape, value, dtype=o_ref.dtype)
        o_ref[...] = jnp.where(global_lane < w_in, x_ref[...], fill)

    return kernel


# --------------------------- wrapper ----------------------------------------


def padding_forward(x, *, dim, pad, value, index=0, nInputDim=0,
                    min_pallas_bytes=_MIN_PALLAS_BYTES,
                    _target_block_bytes=None, _max_block_bytes=None):
    if index != 0:
        raise NotImplementedError("Padding: index != 0 not implemented")

    eff_dim = dim
    if nInputDim != 0:
        eff_dim += x.ndim - nInputDim
    assert 0 <= eff_dim < x.ndim, (dim, nInputDim, x.shape)

    shape = x.shape
    d_in = int(shape[eff_dim])
    pad_amount = abs(int(pad))
    pad_front = pad < 0
    if pad_amount == 0:
        return x

    out_full_shape = list(shape)
    out_full_shape[eff_dim] = d_in + pad_amount
    out_full_shape = tuple(out_full_shape)

    outer = _prod(shape[:eff_dim])
    inner = _prod(shape[eff_dim + 1:])
    d_out = d_in + pad_amount
    itemsize = int(jnp.dtype(x.dtype).itemsize)

    in_bytes = outer * d_in * inner * itemsize
    out_bytes = outer * d_out * inner * itemsize

    # Tiny tensors: the fixed pallas_call overhead dominates -> plain XLA.
    if out_bytes < min_pallas_bytes:
        return padding_reference(x, dim=dim, pad=pad, value=value,
                                 nInputDim=nInputDim)

    target, cap, vmem_limit = _chip_tuning()
    if _target_block_bytes is not None:
        target = int(_target_block_bytes)
    if _max_block_bytes is not None:
        cap = int(_max_block_bytes)

    cost = pl.CostEstimate(flops=0, transcendentals=0,
                           bytes_accessed=int(in_bytes + out_bytes))

    data_w = d_in * inner
    pad_w = pad_amount * inner
    w_in = data_w
    w_out = d_out * inner
    split_w = pad_w if pad_front else data_w
    split_aligned = (split_w % 128) == 0

    # ---- Path A: lane-folded (outer, D*inner), full-width blocks -----------
    # Only when the data/pad split sits on a 128-lane boundary (otherwise a
    # prepend turns the whole data copy into lane-shifted masked stores), or
    # when inner < 128 so the 3-D alternative would be lane-sparse anyway.
    if split_aligned or inner < 128:
        t = _choose_rows(outer, w_out * itemsize, itemsize, target, cap,
                         out_bytes)
        if t is not None:
            x2 = x.reshape(outer, w_in)
            out2 = pl.pallas_call(
                _make_lanefold_kernel(data_w, pad_w, value, pad_front),
                out_shape=jax.ShapeDtypeStruct((outer, w_out), x.dtype),
                grid_spec=pltpu.PrefetchScalarGridSpec(
                    num_scalar_prefetch=0,
                    grid=(pl.cdiv(outer, t),),
                    in_specs=[pl.BlockSpec((t, w_in), lambda i: (i, 0))],
                    out_specs=pl.BlockSpec((t, w_out), lambda i: (i, 0)),
                ),
                # TODO(synk): consider pltpu.CORE_PARALLEL on this axis if
                # profiling shows a single busy TensorCore on v7x.
                compiler_params=pltpu.CompilerParams(
                    dimension_semantics=("parallel",),
                    vmem_limit_bytes=vmem_limit,
                ),
                cost_estimate=cost,
            )(x2)
            return out2.reshape(out_full_shape)

    # ---- Path B: (outer, D, inner) with the split on the sublane axis ------
    if inner >= 128:
        c = _choose_inner_chunk(inner, d_out, itemsize, target, cap)
        if c is not None:
            row3 = d_out * c * itemsize
            t3 = max(1, min(outer, target // max(row3, 1)))
            if out_bytes >= _MIN_PIPELINE_BYTES and outer >= _MIN_GRID_STEPS:
                t3 = max(1, min(t3, outer // _MIN_GRID_STEPS))
            t3 = max(1, min(t3, max(1, cap // row3)))
            x3 = x.reshape(outer, d_in, inner)
            out3 = pl.pallas_call(
                _make_sublane_split_kernel(d_in, pad_amount, value, pad_front),
                out_shape=jax.ShapeDtypeStruct((outer, d_out, inner), x.dtype),
                grid_spec=pltpu.PrefetchScalarGridSpec(
                    num_scalar_prefetch=0,
                    grid=(pl.cdiv(outer, t3), pl.cdiv(inner, c)),
                    in_specs=[pl.BlockSpec((t3, d_in, c),
                                           lambda i, j: (i, 0, j))],
                    out_specs=pl.BlockSpec((t3, d_out, c),
                                           lambda i, j: (i, 0, j)),
                ),
                compiler_params=pltpu.CompilerParams(
                    dimension_semantics=("parallel", "parallel"),
                    vmem_limit_bytes=vmem_limit,
                ),
                cost_estimate=cost,
            )(x3)
            return out3.reshape(out_full_shape)

    # ---- Path C: degenerate rows (one padded row exceeds the block cap) ----
    if pad_front:
        # prepend == flip -> append -> flip; only reached for pathological
        # shapes, so the two extra XLA reversals are an acceptable cost.
        flipped = padding_forward(
            jnp.flip(x, axis=eff_dim), dim=eff_dim, pad=pad_amount,
            value=value, index=0, nInputDim=0,
            min_pallas_bytes=min_pallas_bytes,
            _target_block_bytes=_target_block_bytes,
            _max_block_bytes=_max_block_bytes)
        return jnp.flip(flipped, axis=eff_dim)

    pack = _sublane_pack(itemsize)
    t_c = pack if outer >= pack else outer
    c_target = max(128, (target // max(t_c * itemsize, 1)) // 128 * 128)
    c_cap = (cap // max(t_c * itemsize, 1)) // 128 * 128
    c = max(128, min(c_target, max(c_cap, 128)))
    c = min(c, _round_up(w_out, 128))
    nb_in = pl.cdiv(w_in, c)

    x2 = x.reshape(outer, w_in)
    out2 = pl.pallas_call(
        _make_masked_append_kernel(w_in, value),
        out_shape=jax.ShapeDtypeStruct((outer, w_out), x.dtype),
        grid_spec=pltpu.PrefetchScalarGridSpec(
            num_scalar_prefetch=0,
            grid=(pl.cdiv(outer, t_c), pl.cdiv(w_out, c)),
            in_specs=[pl.BlockSpec(
                (t_c, c), lambda i, j: (i, jnp.minimum(j, nb_in - 1)))],
            out_specs=pl.BlockSpec((t_c, c), lambda i, j: (i, j)),
        ),
        compiler_params=pltpu.CompilerParams(
            dimension_semantics=("parallel", "parallel"),
            vmem_limit_bytes=vmem_limit,
        ),
        cost_estimate=cost,
    )(x2)
    return out2.reshape(out_full_shape)


def padding_reference(x, *, dim, pad, value, nInputDim=0):
    """Pure-JAX reference mirroring the PyTorch forward."""
    eff_dim = dim
    if nInputDim != 0:
        eff_dim += x.ndim - nInputDim
    pad_size = list(x.shape)
    pad_size[eff_dim] = abs(pad)
    padder = jnp.full(pad_size, value, dtype=x.dtype)
    if pad < 0:
        return jnp.concatenate((padder, x), axis=eff_dim)
    return jnp.concatenate((x, padder), axis=eff_dim)


if __name__ == "__main__":

    def check(x, **kw):
        out = jax.block_until_ready(padding_forward(x, **kw))
        ref = padding_reference(x, dim=kw["dim"], pad=kw["pad"],
                                value=kw["value"],
                                nInputDim=kw.get("nInputDim", 0))
        assert out.shape == ref.shape, (out.shape, ref.shape)
        assert bool(jnp.array_equal(out, ref)), "mismatch vs reference"
        return out

    key = jax.random.PRNGKey(0)

    # Module config from the spec: Padding(dim=0, pad=2, value=1.5, index=0,
    # nInputDim=3) on an NCHW input -> pad the channel dim.
    x = jax.random.normal(key, (2, 4, 16, 16), dtype=jnp.float32)
    check(x, dim=0, pad=2, value=1.5, nInputDim=3)                 # tiny -> XLA
    # Same shape, forced through the Pallas lane-fold path (append + prepend).
    check(x, dim=0, pad=2, value=1.5, nInputDim=3, min_pallas_bytes=0)
    check(x, dim=0, pad=-2, value=1.5, nInputDim=3, min_pallas_bytes=0)

    # Larger input -> multi-step lane-folded path (Path A).
    xb = jax.random.normal(jax.random.PRNGKey(1), (32, 8, 32, 128),
                           dtype=jnp.float32)
    check(xb, dim=0, pad=2, value=0.0, nInputDim=3)
    check(xb, dim=0, pad=-2, value=0.0, nInputDim=3)

    # Split not 128-lane aligned, inner >= 128 -> sublane-split path (Path B).
    xm = jax.random.normal(jax.random.PRNGKey(2), (4, 5, 160),
                           dtype=jnp.float32)
    check(xm, dim=1, pad=3, value=-2.0, min_pallas_bytes=0)
    check(xm, dim=1, pad=-3, value=-2.0, min_pallas_bytes=0)

    # Degenerate rows (forced via a tiny block cap) -> masked, lane-tiled
    # path (Path C), append + prepend-via-flip.
    xd = jax.random.normal(jax.random.PRNGKey(3), (16, 40, 48),
                           dtype=jnp.float32)
    check(xd, dim=1, pad=5, value=7.0, min_pallas_bytes=0,
          _max_block_bytes=4096)
    check(xd, dim=1, pad=-5, value=7.0, min_pallas_bytes=0,
          _max_block_bytes=4096)

    print("KERNEL_OK")
</pallas_src>

<mosaic_0001>
module attributes {stable_mosaic.version = 11 : i64} {
  func.func @kernel(%arg0: i32, %arg1: memref<2x1024xf32, #tpu.memory_space<vmem>>, %arg2: memref<2x1536xf32, #tpu.memory_space<vmem>>) attributes {dimension_semantics = [#tpu.dimension_semantics<parallel>], iteration_bounds = array<i64: 1>, scalar_prefetch = 0 : i64, scratch_operands = 0 : i64, tpu.core_type = #tpu.core_type<tc>, window_params = [{transform_indices = @transform_0, window_bounds = array<i64: 2, 1024>}, {transform_indices = @transform_1, window_bounds = array<i64: 2, 1536>}]} {
    %cst = arith.constant 1.500000e+00 : f32
    %0 = vector.broadcast %cst : f32 to vector<2x512xf32>
    %c0 = arith.constant 0 : index
    %c0_0 = arith.constant 0 : index
    %1 = vector.load %arg1[%c0, %c0_0] : memref<2x1024xf32, #tpu.memory_space<vmem>>, vector<2x1024xf32>
    %c0_1 = arith.constant 0 : index
    %c0_2 = arith.constant 0 : index
    %2 = vector.load %arg2[%c0_1, %c0_2] : memref<2x1536xf32, #tpu.memory_space<vmem>>, vector<2x1024xf32>
    tpu.vector_store %arg2[%c0_1, %c0_2], %1 {strides = array<i32>} : memref<2x1536xf32, #tpu.memory_space<vmem>>, vector<2x1024xf32>,
    %c0_3 = arith.constant 0 : index
    %c1024 = arith.constant 1024 : index
    %3 = vector.load %arg2[%c0_3, %c1024] : memref<2x1536xf32, #tpu.memory_space<vmem>>, vector<2x512xf32>
    tpu.vector_store %arg2[%c0_3, %c1024], %0 {strides = array<i32>} : memref<2x1536xf32, #tpu.memory_space<vmem>>, vector<2x512xf32>,
    return
  }
  func.func @transform_0(%arg0: i32) -> (i32, i32) {
    %c0_i32 = arith.constant 0 : i32
    %c0_i32_0 = arith.constant 0 : i32
    return %arg0, %c0_i32 : i32, i32
  }
  func.func @transform_1(%arg0: i32) -> (i32, i32) {
    %c0_i32 = arith.constant 0 : i32
    %c0_i32_0 = arith.constant 0 : i32
    return %arg0, %c0_i32 : i32, i32
  }
}

</mosaic_0001>

<llo_original>
// kernel: tpu_custom_call.1
$region0: #{tpu_custom_call.1}
  #allocation0 [shape = 'u32[]', space=smem, size = 0x4, offset = 0x4, fixed_abs, tag = 'smem constant byte address 0x4 - core index']
  #allocation1 [shape = 'u32[144,128]{1,0:T(1,128)}', space=vmem, size = 0x12000, scoped, tag = 'internal scratch']
  %s0 = inlined_call_operand.hbm [shape: f32[2,1024], index: 0, kind: input, shape index: {}]
  %s1 = inlined_call_operand.hbm [shape: f32[2,1536], index: 1, kind: output, shape index: {}]
  %s2 = sld [smem:[#allocation0]]
  $region18: #{tpu_custom_call.1} parent=0
    _
  %s4 = ssub.s32 1, %s2
  %s5 = scalar_select 0, %s4, %s2
  $region1: #{tpu_custom_call.1} parent=0
    #allocation2 [shape = 'u8[8192]{0}', space=vmem, size = 0x2000, scoped, tag = 'input window, operand 0, single buffered']
    #allocation3 [shape = 's32[1]{0}', space=sflag, size = 0x4, scoped, tag = 'scoped memory for tpu_custom_call.1']
    #allocation4 [shape = 's32[1]{0}', space=sflag, size = 0x4, scoped, tag = 'scoped memory for tpu_custom_call.1']
    #allocation5 [shape = 'u8[12288]{0}', space=vmem, size = 0x3000, scoped, tag = 'output window, operand 0, single buffered']
    %6 = vsyncpa [#allocation3], 0
    %7 = vsyncpa [#allocation4], 0
    // Predicated region
    $region2: #{tpu_custom_call.1} parent=1 // pred_check
      _
    $region3: #{tpu_custom_call.1} parent=1 // pred_check_branch
      %9 = sbr.rel (0) target = $region5
    $region4: #{tpu_custom_call.1} parent=1 // pred_region
      %s11 = ssub.s32 256, 256
      %12 = vsyncadd [#allocation3], %s11
      %s14 = sshll.u32 [#allocation2], 4
      %s15 = int_to_ptr.vmem [resolvable:$true] %s14
      %17 = dma.hbm_to_vmem [thread:$0]  %s0, 256, %s15, [#allocation3]
    $region5: #{tpu_custom_call.1} parent=1 // pred_fallthru
      _
    // Predicated region
    $region6: #{tpu_custom_call.1} parent=1 // pred_check
      _
    $region7: #{tpu_custom_call.1} parent=1 // pred_check_branch
      %19 = sbr.rel (0) target = $region9
    $region8: #{tpu_custom_call.1} parent=1 // pred_region
      %20 = dma.done [#allocation3], 256
    $region9: #{tpu_custom_call.1} parent=1 // pred_fallthru
      _
    %v21 = vld [vmem:[#allocation2] sm:$0xff]
    %v22 = vld [vmem:[#allocation2 + $0x8] sm:$0xff]
    %23 = vst [vmem:[#allocation5] sm:$0xff] %v21
    %24 = vst [vmem:[#allocation5 + $0x8] sm:$0xff] %v22
    %25 = vst [vmem:[#allocation5 + $0x10] sm:$0xff] 1.5
    // Predicated region
    $region10: #{tpu_custom_call.1} parent=1 // pred_check
      _
    $region11: #{tpu_custom_call.1} parent=1 // pred_check_branch
      %27 = sbr.rel (0) target = $region13
    $region12: #{tpu_custom_call.1} parent=1 // pred_region
      %s29 = ssub.s32 384, 384
      %30 = vsyncadd [#allocation4], %s29
      %s32 = sshll.u32 [#allocation5], 4
      %s33 = int_to_ptr.vmem [resolvable:$true] %s32
      %35 = dma.vmem_to_hbm [thread:$0]  %s33, 384, %s1, [#allocation4]
    $region13: #{tpu_custom_call.1} parent=1 // pred_fallthru
      _
    // Predicated region
    $region14: #{tpu_custom_call.1} parent=1 // pred_check
      _
    $region15: #{tpu_custom_call.1} parent=1 // pred_check_branch
      %37 = sbr.rel (0) target = $region17
    $region16: #{tpu_custom_call.1} parent=1 // pred_region
      %38 = dma.done [#allocation4], 384
    $region17: #{tpu_custom_call.1} parent=1 // pred_fallthru
      _
    %39 = vsyncpa [#allocation3], 1
    %40 = vsyncpa [#allocation4], 1

</llo_original>
